<compile_context>
chip_gen: v6e
topology: v6e:2x2x1
jax: 0.10.0
libtpu: 0.0.40
codegen_flags: <defaults>
</compile_context>

<pallas_src>
import functools
import math

import jax
import jax.numpy as jnp
from jax import lax
from jax.experimental import pallas as pl
from jax.experimental.pallas import tpu as pltpu


def _round_up(x, m):
    return ((x + m - 1) // m) * m


def _rmsnorm_kernel(x_ref, w_ref, o_ref, *, eps, inv_dim, x_dtype,
                    cast_roundtrip):
    # Hot path: square, row-sum, rsqrt (EUP slot), scale — all in f32 on the
    # VALU; a single cast at the store.
    x = x_ref[...].astype(jnp.float32)                        # x.float()
    ss = jnp.sum(x * x, axis=-1, keepdims=True)               # sum over lanes
    inv = lax.rsqrt(ss * inv_dim + eps)                       # rsqrt(mean + eps)
    normed = x * inv
    if cast_roundtrip:
        # Preserve torch's `.type_as(x)` rounding before the weight multiply
        # (only emitted when x is a low-precision dtype).
        normed = normed.astype(x_dtype).astype(jnp.float32)
    out = normed * w_ref[...].astype(jnp.float32)             # * self.weight
    o_ref[...] = out.astype(o_ref.dtype)


def _tpu_generation_params():
    """Return (num_tensorcores, vmem_limit_bytes, default_budget_bytes)."""
    num_cores = 1
    try:
        kind = jax.devices()[0].device_kind.lower()
        if "v7" in kind or "7x" in kind:
            num_cores = 2          # v7x: 2 TensorCores per chip
    except Exception:
        pass
    vmem_cap = None
    try:
        vmem_cap = int(pltpu.get_tpu_info().vmem_capacity_bytes)
    except Exception:
        vmem_cap = None
    if vmem_cap is None:
        vmem_cap = 64 * 1024 * 1024 if num_cores == 2 else 128 * 1024 * 1024
    if vmem_cap >= 100 * 1024 * 1024:
        # v5e / v6e: 128 MiB physical VMEM -> bigger tiles, fewer grid steps.
        limit = 64 * 1024 * 1024
        budget = 24 * 1024 * 1024
    else:
        # v7x: only 64 MiB per TensorCore -> cap the ask, leave headroom for
        # Mosaic scratch and the double-buffered pipeline.
        limit = 40 * 1024 * 1024
        budget = 16 * 1024 * 1024
    return num_cores, limit, budget


def _choose_block_rows(rows, dim, x_itemsize, out_itemsize, sublane,
                       vmem_budget_bytes, num_cores):
    """Pick (block_rows, padded_rows).

    Strongly prefers tiles that divide `rows` exactly so the wrapper never has
    to jnp.pad the input / slice the output (each is a full extra HBM pass).
    """
    # Per-grid-step working set: double-buffered input + output tiles plus the
    # single-buffered f32 copy of x (reused for the sum and the scale pass)
    # and a little slack for the x*x temporary.
    per_row_bytes = 2 * dim * (x_itemsize + out_itemsize) + 6 * dim
    max_rows = max(sublane, vmem_budget_bytes // per_row_bytes)
    max_rows = max(sublane, (max_rows // sublane) * sublane)

    # Small problems: one tile covering everything (block dims == full array
    # dims, so no divisibility constraint and no padding). On a 2-TC chip only
    # keep this when the problem is too small to be worth splitting.
    if rows <= max_rows and (num_cores == 1 or rows < 4 * sublane):
        return rows, rows

    def _divisor_search(align, min_steps, balanced):
        best = 0
        d = 1
        while d * d <= rows:
            if rows % d == 0:
                for cand in (d, rows // d):
                    steps = rows // cand
                    if cand % align != 0 or cand > max_rows:
                        continue
                    if steps < min_steps:
                        continue
                    if balanced and steps % num_cores != 0:
                        continue
                    best = max(best, cand)
            d += 1
        return best

    # Preferred: largest divisor of rows that is a multiple of the sublane
    # packing (falling back to 8), fits the budget, and — on multi-TC chips —
    # gives each TensorCore at least two grid steps (balanced, even split) so
    # the per-core pipeline overlaps prefetch with writeback.
    min_steps = 2 * num_cores if num_cores > 1 else 1
    for align in (sublane, 8):
        cand = _divisor_search(align, min_steps, num_cores > 1)
        if cand:
            return cand, rows
    if num_cores > 1:
        # Relax the balanced-split constraint before giving up on divisors.
        for align in (sublane, 8):
            cand = _divisor_search(align, 1, False)
            if cand:
                return cand, rows

    # Fallback (rows has no usable divisor, e.g. a prime row count larger than
    # the budget): pad rows up to a multiple of a budget-derived tile. This is
    # the only path that still costs an extra HBM pad copy + output slice.
    block = min(max_rows, 1024)
    block = max(sublane, (block // sublane) * sublane)
    return block, _round_up(rows, block)


def rmsnorm(x, weight, eps=1e-6, block_rows=None, vmem_budget_bytes=None):
    """RMSNorm over the last axis. x: [..., dim], weight: [dim]."""
    orig_shape = x.shape
    dim = orig_shape[-1]
    rows = int(math.prod(orig_shape[:-1])) if len(orig_shape) > 1 else 1

    out_dtype = jnp.result_type(x.dtype, weight.dtype)
    x_itemsize = jnp.dtype(x.dtype).itemsize
    out_itemsize = jnp.dtype(out_dtype).itemsize
    w_itemsize = jnp.dtype(weight.dtype).itemsize
    sublane = max(8, 32 // x_itemsize)          # 8 f32, 16 bf16, 32 int8/fp8

    num_cores, vmem_limit_bytes, default_budget = _tpu_generation_params()
    if vmem_budget_bytes is None:
        vmem_budget_bytes = default_budget

    if block_rows is None:
        block_rows, rows_p = _choose_block_rows(
            rows, dim, x_itemsize, out_itemsize, sublane,
            vmem_budget_bytes, num_cores)
    else:
        block_rows = max(sublane, _round_up(block_rows, sublane))
        rows_p = _round_up(rows, block_rows)

    grid = (rows_p // block_rows,)

    x2d = x.reshape(rows, dim)
    if rows_p != rows:
        # Fallback path only; the divisor-based tiling above avoids it for
        # typical shapes.
        x2d = jnp.pad(x2d, ((0, rows_p - rows), (0, 0)))
    w2d = weight.reshape(1, dim)

    kernel = functools.partial(
        _rmsnorm_kernel, eps=eps, inv_dim=1.0 / dim, x_dtype=x.dtype,
        cast_roundtrip=(jnp.dtype(x.dtype) != jnp.dtype(jnp.float32)))

    # Mem-bound cost hint: read x, write out, read tiny weight.
    cost = pl.CostEstimate(
        flops=3 * rows * dim,
        transcendentals=rows,
        bytes_accessed=rows * dim * (x_itemsize + out_itemsize)
        + dim * w_itemsize,
    )

    out = pl.pallas_call(
        kernel,
        out_shape=jax.ShapeDtypeStruct((rows_p, dim), out_dtype),
        grid_spec=pltpu.PrefetchScalarGridSpec(
            num_scalar_prefetch=0,
            grid=grid,
            in_specs=[
                # Last block dim == full array dim (legal even when dim is not
                # a multiple of 128): no HBM-side lane padding needed.
                pl.BlockSpec((block_rows, dim), lambda i: (i, 0)),
                # Weight: constant block index -> stays resident, no re-DMA.
                pl.BlockSpec((1, dim), lambda i: (0, 0)),
            ],
            out_specs=pl.BlockSpec((block_rows, dim), lambda i: (i, 0)),
        ),
        compiler_params=pltpu.CompilerParams(
            dimension_semantics=("parallel",),
            vmem_limit_bytes=vmem_limit_bytes,
        ),
        cost_estimate=cost,
    )(x2d, w2d)

    if rows_p != rows:
        out = out[:rows]
    return out.reshape(orig_shape)


def rmsnorm_ref(x, weight, eps=1e-6):
    xf = x.astype(jnp.float32)
    normed = xf * lax.rsqrt(jnp.mean(xf * xf, axis=-1, keepdims=True) + eps)
    normed = normed.astype(x.dtype)
    return normed * weight


if __name__ == "__main__":
    key = jax.random.PRNGKey(0)

    # Shapes consistent with the module's demo config (small).
    batch, seq, hidden = 2, 8, 32
    x = jax.random.normal(key, (batch, seq, hidden), dtype=jnp.float32)
    weight = jnp.ones((hidden,), dtype=jnp.float32)  # nn.Parameter(torch.ones(dim))

    out = jax.block_until_ready(rmsnorm(x, weight))
    ref = rmsnorm_ref(x, weight)
    assert out.shape == x.shape
    assert jnp.allclose(out, ref, atol=1e-5, rtol=1e-5)

    # Ragged shape (rows not a multiple of 8, dim not a multiple of 128)
    # exercises the full-dim block / single-tile path (no HBM pad copies).
    k2 = jax.random.PRNGKey(1)
    x2 = jax.random.normal(k2, (3, 5, 48), dtype=jnp.float32)
    w2 = jax.random.normal(jax.random.PRNGKey(2), (48,), dtype=jnp.float32)
    out2 = jax.block_until_ready(rmsnorm(x2, w2))
    ref2 = rmsnorm_ref(x2, w2)
    assert out2.shape == x2.shape
    assert jnp.allclose(out2, ref2, atol=1e-5, rtol=1e-5)

    # Larger multi-step shape (rows divisible by the chosen tile) exercises the
    # divisor-based grid path and, on multi-TC chips, the balanced split.
    k3 = jax.random.PRNGKey(3)
    x3 = jax.random.normal(k3, (4, 64, 256), dtype=jnp.bfloat16)
    w3 = jnp.ones((256,), dtype=jnp.float32)
    out3 = jax.block_until_ready(rmsnorm(x3, w3))
    ref3 = rmsnorm_ref(x3, w3)
    assert out3.shape == x3.shape
    assert jnp.allclose(out3.astype(jnp.float32), ref3.astype(jnp.float32),
                        atol=2e-2, rtol=2e-2)

    print("KERNEL_OK")
</pallas_src>

<mosaic_0001>
module attributes {stable_mosaic.version = 11 : i64} {
  func.func @_rmsnorm_kernel(%arg0: i32, %arg1: memref<16x32xf32, #tpu.memory_space<vmem>>, %arg2: memref<1x32xf32, #tpu.memory_space<vmem>>, %arg3: memref<16x32xf32, #tpu.memory_space<vmem>>) attributes {dimension_semantics = [#tpu.dimension_semantics<parallel>], iteration_bounds = array<i64: 1>, scalar_prefetch = 0 : i64, scratch_operands = 0 : i64, tpu.core_type = #tpu.core_type<tc>, window_params = [{transform_indices = @transform_0, window_bounds = array<i64: 16, 32>}, {pipeline_mode = #tpu.pipeline_mode<synchronous>, transform_indices = @transform_1, window_bounds = array<i64: 1, 32>}, {transform_indices = @transform_2, window_bounds = array<i64: 16, 32>}]} {
    %c0 = arith.constant 0 : index
    %c0_0 = arith.constant 0 : index
    %0 = vector.load %arg1[%c0, %c0_0] : memref<16x32xf32, #tpu.memory_space<vmem>>, vector<16x32xf32>
    %1 = arith.mulf %0, %0 : vector<16x32xf32>
    %cst = arith.constant dense<0.000000e+00> : vector<16xf32>
    %2 = vector.multi_reduction <add>, %1, %cst [1] : vector<16x32xf32> to vector<16xf32>
    %3 = vector.shape_cast %2 : vector<16xf32> to vector<16x1xf32>
    %cst_1 = arith.constant 3.125000e-02 : f32
    %4 = vector.broadcast %cst_1 : f32 to vector<16x1xf32>
    %5 = arith.mulf %3, %4 : vector<16x1xf32>
    %cst_2 = arith.constant 9.99999997E-7 : f32
    %6 = vector.broadcast %cst_2 : f32 to vector<16x1xf32>
    %7 = arith.addf %5, %6 : vector<16x1xf32>
    %8 = math.rsqrt %7 : vector<16x1xf32>
    %9 = vector.broadcast %8 : vector<16x1xf32> to vector<16x32xf32>
    %10 = arith.mulf %0, %9 : vector<16x32xf32>
    %c0_3 = arith.constant 0 : index
    %c0_4 = arith.constant 0 : index
    %11 = vector.load %arg2[%c0_3, %c0_4] : memref<1x32xf32, #tpu.memory_space<vmem>>, vector<1x32xf32>
    %12 = vector.broadcast %11 : vector<1x32xf32> to vector<16x32xf32>
    %13 = arith.mulf %10, %12 : vector<16x32xf32>
    %c0_5 = arith.constant 0 : index
    %c0_6 = arith.constant 0 : index
    %14 = vector.load %arg3[%c0_5, %c0_6] : memref<16x32xf32, #tpu.memory_space<vmem>>, vector<16x32xf32>
    tpu.vector_store %arg3[%c0_5, %c0_6], %13 {strides = array<i32>} : memref<16x32xf32, #tpu.memory_space<vmem>>, vector<16x32xf32>,
    return
  }
  func.func @transform_0(%arg0: i32) -> (i32, i32) {
    %c0_i32 = arith.constant 0 : i32
    %c0_i32_0 = arith.constant 0 : i32
    return %arg0, %c0_i32 : i32, i32
  }
  func.func @transform_1(%arg0: i32) -> (i32, i32) {
    %c0_i32 = arith.constant 0 : i32
    %c0_i32_0 = arith.constant 0 : i32
    %c0_i32_1 = arith.constant 0 : i32
    return %c0_i32, %c0_i32_0 : i32, i32
  }
  func.func @transform_2(%arg0: i32) -> (i32, i32) {
    %c0_i32 = arith.constant 0 : i32
    %c0_i32_0 = arith.constant 0 : i32
    return %arg0, %c0_i32 : i32, i32
  }
}

</mosaic_0001>

<llo_original>
// kernel: tpu_custom_call.1
$region0: #{tpu_custom_call.1}
  #allocation0 [shape = 'u32[]', space=smem, size = 0x4, offset = 0x4, fixed_abs, tag = 'smem constant byte address 0x4 - core index']
  #allocation1 [shape = 'u32[144,128]{1,0:T(1,128)}', space=vmem, size = 0x12000, scoped, tag = 'internal scratch']
  %s0 = inlined_call_operand.hbm [shape: f32[16,32], index: 0, kind: input, shape index: {}]
  %s1 = inlined_call_operand.vmem [shape: f32[1,32], index: 1, kind: input, shape index: {}]
  %s2 = inlined_call_operand.hbm [shape: f32[16,32], index: 2, kind: output, shape index: {}]
  %s3 = sld [smem:[#allocation0]]
  $region22: #{tpu_custom_call.1} parent=0
    _
  %s5 = ssub.s32 1, %s3
  %s6 = scalar_select 0, %s5, %s3
  $region1: #{tpu_custom_call.1} parent=0
    #allocation2 [shape = 'u8[8192]{0}', space=vmem, size = 0x2000, scoped, tag = 'input window, operand 0, single buffered']
    #allocation3 [shape = 's32[1]{0}', space=sflag, size = 0x4, scoped, tag = 'scoped memory for tpu_custom_call.1']
    #allocation4 [shape = 's32[1]{0}', space=sflag, size = 0x4, scoped, tag = 'scoped memory for tpu_custom_call.1']
    #allocation5 [shape = 'u8[8192]{0}', space=vmem, size = 0x2000, scoped, tag = 'output window, operand 0, single buffered']
    %7 = vsyncpa [#allocation3], 0
    %8 = vsyncpa [#allocation4], 0
    // Predicated region
    $region2: #{tpu_custom_call.1} parent=1 // pred_check
      _
    $region3: #{tpu_custom_call.1} parent=1 // pred_check_branch
      %10 = sbr.rel (0) target = $region5
    $region4: #{tpu_custom_call.1} parent=1 // pred_region
      %s12 = ssub.s32 256, 256
      %13 = vsyncadd [#allocation3], %s12
      %s14 = sshll.u32 [#allocation2], 4
      %s15 = int_to_ptr.vmem [resolvable:$true] %s14
      %20 = dma.hbm_to_vmem [thread:$0]  %s0, 256, %s15, [#allocation3], 128, 128, 8
    $region5: #{tpu_custom_call.1} parent=1 // pred_fallthru
      _
    // Predicated region
    $region6: #{tpu_custom_call.1} parent=1 // pred_check
      _
    $region7: #{tpu_custom_call.1} parent=1 // pred_check_branch
      %22 = sbr.rel (0) target = $region9
    $region8: #{tpu_custom_call.1} parent=1 // pred_region
      _
    $region9: #{tpu_custom_call.1} parent=1 // pred_fallthru
      _
    // Predicated region
    $region10: #{tpu_custom_call.1} parent=1 // pred_check
      _
    $region11: #{tpu_custom_call.1} parent=1 // pred_check_branch
      %24 = sbr.rel (0) target = $region13
    $region12: #{tpu_custom_call.1} parent=1 // pred_region
      %25 = dma.done [#allocation3], 256
    $region13: #{tpu_custom_call.1} parent=1 // pred_fallthru
      _
    %v26 = vld [vmem:[#allocation2] sm:$0xff]
    %v27 = vld [vmem:[#allocation2 + $0x8] sm:$0xff]
    %v28 = vmul.f32 %v26, %v26
    %v29 = vmul.f32 %v27, %v27
    %vm30 = vcmask 261120
    %v31 = vsel %vm30, %v28, 0.0
    %32 = vadd.xlane.f32.xlu0 %v31
    %v33 = vpop.xlane.xlu0 %32
    %v34 = vsel %vm30, %v29, 0.0
    %35 = vadd.xlane.f32.xlu0 %v34
    %v36 = vpop.xlane.xlu0 %35
    %v37 = vmul.f32 %v33, 0.03125
    %v38 = vmul.f32 %v36, 0.03125
    %v39 = vadd.f32 %v37, 1e-06
    %v40 = vadd.f32 %v38, 1e-06
    %v41 = vrsqrt.pop %v39
    %v42 = vrsqrt.pop %v40
    %v43 = vmul.f32 %v26, %v41
    %v44 = vmul.f32 %v27, %v42
    %v45 = vld [vmem:[%s1] sm:$0x1]
    %v47 = vlaneseq
    %v48 = vshrl.u32 %v47, 7
    %v49 = vsub.s32 0, %v48
    %v50 = vrot.slane %v45, %v49
    %v52 = vmul.f32 %v43, %v50
    %v53 = vmul.f32 %v44, %v50
    %54 = vst.msk [vmem:[#allocation5] sm:$0xff] %vm30, %v52
    %55 = vst.msk [vmem:[#allocation5 + $0x8] sm:$0xff] %vm30, %v53
    // Predicated region
    $region14: #{tpu_custom_call.1} parent=1 // pred_check
      _
    $region15: #{tpu_custom_call.1} parent=1 // pred_check_branch
      %57 = sbr.rel (0) target = $region17
    $region16: #{tpu_custom_call.1} parent=1 // pred_region
      %s59 = ssub.s32 256, 256
      %60 = vsyncadd [#allocation4], %s59
      %s61 = sshll.u32 [#allocation5], 4
      %s62 = int_to_ptr.vmem [resolvable:$true] %s61
      %67 = dma.vmem_to_hbm [thread:$0]  %s62, 256, %s2, [#allocation4], 128, 128, 8
    $region17: #{tpu_custom_call.1} parent=1 // pred_fallthru
      _
    // Predicated region
    $region18: #{tpu_custom_call.1} parent=1 // pred_check
      _
    $region19: #{tpu_custom_call.1} parent=1 // pred_check_branch
      %69 = sbr.rel (0) target = $region21
    $region20: #{tpu_custom_call.1} parent=1 // pred_region
      %70 = dma.done [#allocation4], 256
    $region21: #{tpu_custom_call.1} parent=1 // pred_fallthru
      _
    %71 = vsyncpa [#allocation3], 1
    %72 = vsyncpa [#allocation4], 1

</llo_original>
